<compile_context>
chip_gen: v7x
topology: tpu7x:2x2x1
jax: 0.10.0
libtpu: 0.0.40
codegen_flags: <defaults>
</compile_context>

<pallas_src>
import jax
import jax.numpy as jnp
from jax import lax
from jax.experimental import pallas as pl
from jax.experimental.pallas import tpu as pltpu

_EPS = 1e-5  # matches torch.nn.InstanceNorm2d default


def _ccin_kernel(x_ref, gb_ref, o_ref):
    # x_ref: (TR, HW)  rows = (n, c) instances, full spatial extent per row.
    # gb_ref: (TR, 2)  [:, 0] = gamma, [:, 1] = beta per row.
    # o_ref: (TR, HW)
    # Pass 1: per-row mean (read x_ref fresh each pass to keep f32 temps short-lived).
    mean = jnp.mean(x_ref[...].astype(jnp.float32), axis=-1, keepdims=True)       # (TR, 1)
    # Pass 2: biased variance (1/HW), centered to avoid E[x^2]-mean^2 cancellation.
    centered = x_ref[...].astype(jnp.float32) - mean
    var = jnp.mean(centered * centered, axis=-1, keepdims=True)                   # (TR, 1)
    # Fold the affine into per-row scale/shift -> elementwise pass is one mul + one add.
    gamma = gb_ref[:, 0:1].astype(jnp.float32)
    beta = gb_ref[:, 1:2].astype(jnp.float32)
    scale = gamma * lax.rsqrt(var + _EPS)                                         # (TR, 1)
    shift = beta - mean * scale                                                   # (TR, 1)
    o_ref[...] = (x_ref[...].astype(jnp.float32) * scale + shift).astype(o_ref.dtype)


def _round_up(a, b):
    return (a + b - 1) // b * b


def categorical_conditional_instance_norm_2d(x, y, embed_weight, num_features,
                                             *, target_block_bytes=1 << 20):
    """x: (N, C, H, W); y: (N,) int32 style ids;
    embed_weight: (n_styles, 2*C) with [:, :C] = gamma, [:, C:] = beta."""
    N, C, H, W = x.shape
    assert C == num_features
    HW = H * W
    R = N * C

    # Glue: embedding gather + chunk(2, dim=1), flattened to one (R, 2) input.
    emb = jnp.take(embed_weight, y, axis=0)                 # (N, 2C)
    gamma = emb[:, :C].reshape(R, 1)
    beta = emb[:, C:].reshape(R, 1)
    gb = jnp.concatenate([gamma, beta], axis=1)             # (R, 2)

    x_flat = x.reshape(R, HW)                               # rows = (n, c); lanes = spatial

    # Row-tile selection: sublane-aligned, ~target_block_bytes of input per block,
    # and small enough to leave >= ~8 grid steps when R is large.
    itemsize = jnp.dtype(x.dtype).itemsize
    sub = 8 if itemsize >= 4 else (16 if itemsize == 2 else 32)
    rows_budget = max(sub, (target_block_bytes // max(1, HW * itemsize)) // sub * sub)
    rows_for_steps = max(sub, _round_up(pl.cdiv(R, 8), sub))
    TR = max(sub, min(rows_budget, rows_for_steps, _round_up(R, sub)))

    R_pad = _round_up(R, TR)
    if R_pad != R:
        # Padded rows yield garbage stats but are sliced away; var+eps > 0 so no NaNs,
        # and per-row reductions mean padding never biases real rows' statistics.
        x_flat = jnp.pad(x_flat, ((0, R_pad - R), (0, 0)))
        gb = jnp.pad(gb, ((0, R_pad - R), (0, 0)))

    grid = (R_pad // TR,)

    # VMEM estimate: double-buffered in + out tiles, gb tiles, plus f32 temps.
    est_bytes = 2 * (TR * HW * itemsize) * 2 + 2 * (TR * 2 * 4) + 2 * (TR * HW * 4)
    vmem_limit = int(min(64 * 2**20, max(32 * 2**20, 2 * est_bytes)))
    # TODO(synk): for HW so large that even an 8-row tile exceeds the VMEM budget,
    # switch to a two-pass (HW-chunked sum/sumsq accumulate, then normalize) scheme.

    out_flat = pl.pallas_call(
        _ccin_kernel,
        out_shape=jax.ShapeDtypeStruct((R_pad, HW), x.dtype),
        grid_spec=pltpu.PrefetchScalarGridSpec(
            num_scalar_prefetch=0,
            grid=grid,
            in_specs=[
                pl.BlockSpec((TR, HW), lambda r: (r, 0)),
                pl.BlockSpec((TR, 2), lambda r: (r, 0)),
            ],
            out_specs=pl.BlockSpec((TR, HW), lambda r: (r, 0)),
        ),
        compiler_params=pltpu.CompilerParams(
            dimension_semantics=("parallel",),
            vmem_limit_bytes=vmem_limit,
        ),
    )(x_flat, gb)

    return out_flat[:R].reshape(N, C, H, W)


def _reference(x, y, embed_weight, num_features):
    """Pure-JAX reference matching the PyTorch forward."""
    N, C, H, W = x.shape
    xf = x.astype(jnp.float32)
    mean = jnp.mean(xf, axis=(2, 3), keepdims=True)
    var = jnp.mean((xf - mean) ** 2, axis=(2, 3), keepdims=True)
    out = (xf - mean) / jnp.sqrt(var + _EPS)
    emb = jnp.take(embed_weight, y, axis=0)
    gamma = emb[:, :C].reshape(N, C, 1, 1)
    beta = emb[:, C:].reshape(N, C, 1, 1)
    return gamma * out + beta


if __name__ == "__main__":
    num_features = 4
    n_styles = 5
    N, C, H, W = 2, num_features, 16, 16

    key = jax.random.PRNGKey(0)
    kx, ke, ky = jax.random.split(key, 3)

    # Deterministic parameter init mirroring the module's __init__:
    # embed.weight[:, :num_features] ~ N(1, 0.02); [:, num_features:] = 0
    gamma_init = 1.0 + 0.02 * jax.random.normal(ke, (n_styles, num_features),
                                                dtype=jnp.float32)
    beta_init = jnp.zeros((n_styles, num_features), dtype=jnp.float32)
    embed_weight = jnp.concatenate([gamma_init, beta_init], axis=1)  # (n_styles, 2C)

    x = jax.random.normal(kx, (N, C, H, W), dtype=jnp.float32)
    y = jax.random.randint(ky, (N,), 0, n_styles, dtype=jnp.int32)

    out = categorical_conditional_instance_norm_2d(x, y, embed_weight, num_features)
    out = jax.block_until_ready(out)

    ref = _reference(x, y, embed_weight, num_features)
    assert out.shape == (N, C, H, W)
    assert jnp.allclose(out, ref, atol=1e-5, rtol=1e-5)

    print("KERNEL_OK")
</pallas_src>

<mosaic_0001>
module attributes {stable_mosaic.version = 11 : i64} {
  func.func @_ccin_kernel(%arg0: i32, %arg1: memref<8x256xf32, #tpu.memory_space<vmem>>, %arg2: memref<8x2xf32, #tpu.memory_space<vmem>>, %arg3: memref<8x256xf32, #tpu.memory_space<vmem>>) attributes {dimension_semantics = [#tpu.dimension_semantics<parallel>], iteration_bounds = array<i64: 1>, scalar_prefetch = 0 : i64, scratch_operands = 0 : i64, tpu.core_type = #tpu.core_type<tc>, window_params = [{transform_indices = @transform_0, window_bounds = array<i64: 8, 256>}, {transform_indices = @transform_1, window_bounds = array<i64: 8, 2>}, {transform_indices = @transform_2, window_bounds = array<i64: 8, 256>}]} {
    %c0 = arith.constant 0 : index
    %c0_0 = arith.constant 0 : index
    %0 = vector.load %arg1[%c0, %c0_0] : memref<8x256xf32, #tpu.memory_space<vmem>>, vector<8x256xf32>
    %cst = arith.constant dense<0.000000e+00> : vector<8xf32>
    %1 = vector.multi_reduction <add>, %0, %cst [1] : vector<8x256xf32> to vector<8xf32>
    %2 = vector.shape_cast %1 : vector<8xf32> to vector<8x1xf32>
    %cst_1 = arith.constant 2.560000e+02 : f32
    %3 = vector.broadcast %cst_1 : f32 to vector<8x1xf32>
    %4 = arith.divf %2, %3 : vector<8x1xf32>
    %c0_2 = arith.constant 0 : index
    %c0_3 = arith.constant 0 : index
    %5 = vector.load %arg1[%c0_2, %c0_3] : memref<8x256xf32, #tpu.memory_space<vmem>>, vector<8x256xf32>
    %6 = vector.broadcast %4 : vector<8x1xf32> to vector<8x256xf32>
    %7 = arith.subf %5, %6 : vector<8x256xf32>
    %8 = arith.mulf %7, %7 : vector<8x256xf32>
    %cst_4 = arith.constant dense<0.000000e+00> : vector<8xf32>
    %9 = vector.multi_reduction <add>, %8, %cst_4 [1] : vector<8x256xf32> to vector<8xf32>
    %10 = vector.shape_cast %9 : vector<8xf32> to vector<8x1xf32>
    %cst_5 = arith.constant 2.560000e+02 : f32
    %11 = vector.broadcast %cst_5 : f32 to vector<8x1xf32>
    %12 = arith.divf %10, %11 : vector<8x1xf32>
    %c0_6 = arith.constant 0 : index
    %c0_7 = arith.constant 0 : index
    %13 = vector.load %arg2[%c0_6, %c0_7] : memref<8x2xf32, #tpu.memory_space<vmem>>, vector<8x1xf32>
    %c0_8 = arith.constant 0 : index
    %c1 = arith.constant 1 : index
    %14 = vector.load %arg2[%c0_8, %c1] : memref<8x2xf32, #tpu.memory_space<vmem>>, vector<8x1xf32>
    %cst_9 = arith.constant 9.99999974E-6 : f32
    %15 = vector.broadcast %cst_9 : f32 to vector<8x1xf32>
    %16 = arith.addf %12, %15 : vector<8x1xf32>
    %17 = math.rsqrt %16 : vector<8x1xf32>
    %18 = arith.mulf %13, %17 : vector<8x1xf32>
    %19 = arith.mulf %4, %18 : vector<8x1xf32>
    %20 = arith.subf %14, %19 : vector<8x1xf32>
    %c0_10 = arith.constant 0 : index
    %c0_11 = arith.constant 0 : index
    %21 = vector.load %arg1[%c0_10, %c0_11] : memref<8x256xf32, #tpu.memory_space<vmem>>, vector<8x256xf32>
    %22 = vector.broadcast %18 : vector<8x1xf32> to vector<8x256xf32>
    %23 = arith.mulf %21, %22 : vector<8x256xf32>
    %24 = vector.broadcast %20 : vector<8x1xf32> to vector<8x256xf32>
    %25 = arith.addf %23, %24 : vector<8x256xf32>
    %c0_12 = arith.constant 0 : index
    %c0_13 = arith.constant 0 : index
    %26 = vector.load %arg3[%c0_12, %c0_13] : memref<8x256xf32, #tpu.memory_space<vmem>>, vector<8x256xf32>
    tpu.vector_store %arg3[%c0_12, %c0_13], %25 {strides = array<i32>} : memref<8x256xf32, #tpu.memory_space<vmem>>, vector<8x256xf32>,
    return
  }
  func.func @transform_0(%arg0: i32) -> (i32, i32) {
    %c0_i32 = arith.constant 0 : i32
    %c0_i32_0 = arith.constant 0 : i32
    return %arg0, %c0_i32 : i32, i32
  }
  func.func @transform_1(%arg0: i32) -> (i32, i32) {
    %c0_i32 = arith.constant 0 : i32
    %c0_i32_0 = arith.constant 0 : i32
    return %arg0, %c0_i32 : i32, i32
  }
  func.func @transform_2(%arg0: i32) -> (i32, i32) {
    %c0_i32 = arith.constant 0 : i32
    %c0_i32_0 = arith.constant 0 : i32
    return %arg0, %c0_i32 : i32, i32
  }
}

</mosaic_0001>

<llo_original>
// kernel: tpu_custom_call.1
$region0: #{tpu_custom_call.1}
  #allocation0 [shape = 'u32[]', space=smem, size = 0x4, offset = 0x4, fixed_abs, tag = 'smem constant byte address 0x4 - core index']
  #allocation1 [shape = 'u32[144,128]{1,0:T(1,128)}', space=vmem, size = 0x12000, scoped, tag = 'internal scratch']
  %s0 = inlined_call_operand.hbm [shape: f32[8,256], index: 0, kind: input, shape index: {}]
  %s1 = inlined_call_operand.vmem [shape: f32[8,2], index: 1, kind: input, shape index: {}]
  %s2 = inlined_call_operand.hbm [shape: f32[8,256], index: 2, kind: output, shape index: {}]
  %s3 = sld [smem:[#allocation0]]
  $region22: #{tpu_custom_call.1} parent=0
    _
  %s5 = ssub.s32 1, %s3
  %s6 = scalar_select 0, %s5, %s3
  $region1: #{tpu_custom_call.1} parent=0
    #allocation2 [shape = 'u8[8192]{0}', space=vmem, size = 0x2000, scoped, tag = 'input window, operand 0, single buffered']
    #allocation3 [shape = 's32[1]{0}', space=sflag, size = 0x4, scoped, tag = 'scoped memory for tpu_custom_call.1']
    #allocation4 [shape = 's32[1]{0}', space=sflag, size = 0x4, scoped, tag = 'scoped memory for tpu_custom_call.1']
    #allocation5 [shape = 'u8[8192]{0}', space=vmem, size = 0x2000, scoped, tag = 'output window, operand 0, single buffered']
    %7 = vsyncpa [#allocation3], 0
    %8 = vsyncpa [#allocation4], 0
    // Predicated region
    $region2: #{tpu_custom_call.1} parent=1 // pred_check
      _
    $region3: #{tpu_custom_call.1} parent=1 // pred_check_branch
      %10 = sbr.rel (0) target = $region5
    $region4: #{tpu_custom_call.1} parent=1 // pred_region
      %s12 = ssub.s32 256, 256
      %13 = vsyncadd [#allocation3], %s12
      %s15 = sshll.u32 [#allocation2], 4
      %s16 = int_to_ptr.vmem [resolvable:$true] %s15
      %18 = dma.hbm_to_vmem [thread:$0]  %s0, 256, %s16, [#allocation3]
    $region5: #{tpu_custom_call.1} parent=1 // pred_fallthru
      _
    // Predicated region
    $region6: #{tpu_custom_call.1} parent=1 // pred_check
      _
    $region7: #{tpu_custom_call.1} parent=1 // pred_check_branch
      %20 = sbr.rel (0) target = $region9
    $region8: #{tpu_custom_call.1} parent=1 // pred_region
      _
    $region9: #{tpu_custom_call.1} parent=1 // pred_fallthru
      _
    // Predicated region
    $region10: #{tpu_custom_call.1} parent=1 // pred_check
      _
    $region11: #{tpu_custom_call.1} parent=1 // pred_check_branch
      %22 = sbr.rel (0) target = $region13
    $region12: #{tpu_custom_call.1} parent=1 // pred_region
      %23 = dma.done [#allocation3], 256
    $region13: #{tpu_custom_call.1} parent=1 // pred_fallthru
      _
    %v24 = vld [vmem:[#allocation2] sm:$0xff]
    %v25 = vld [vmem:[#allocation2 + $0x8] sm:$0xff]
    %v26 = vadd.f32 %v24, %v25
    %27 = vadd.xlane.f32.xlu0 %v26
    %v28 = vpop.xlane.xlu0 %27
    %v29 = vrcp.pop 256.0
    %v30 = vmul.f32 %v28, %v29
    %v31 = vsub.f32 %v24, %v30
    %v32 = vsub.f32 %v25, %v30
    %v33 = vmul.f32 %v31, %v31
    %v34 = vmul.f32 %v32, %v32
    %v35 = vadd.f32 %v33, %v34
    %36 = vadd.xlane.f32.xlu0 %v35
    %v37 = vpop.xlane.xlu0 %36
    %v38 = vmul.f32 %v37, %v29
    %v39 = vld [vmem:[%s1] sm:$0xff]
    %v40 = vadd.f32 %v38, 1e-05
    %v41 = vrsqrt.pop %v40
    %v42 = vmul.f32 %v39, %v41
    %v43 = vmul.f32 %v30, %v42
    %45 = vrot.lane.b32.xlu0 %v43, 1
    %v46 = vpop.permute.xlu0 %45
    %v48 = vsub.f32 %v39, %v46
    %50 = vset.pattern.permute.xlu0 0
    %51 = vperm.xlu0 %50, %v42
    %v52 = vpop.permute.xlu0 %51
    %v54 = vmul.f32 %v24, %v52
    %v55 = vmul.f32 %v25, %v52
    %57 = vset.pattern.permute.xlu0 1
    %58 = vperm.xlu0 %57, %v48
    %v59 = vpop.permute.xlu0 %58
    %v61 = vadd.f32 %v54, %v59
    %v62 = vadd.f32 %v55, %v59
    %63 = vst [vmem:[#allocation5] sm:$0xff] %v61
    %64 = vst [vmem:[#allocation5 + $0x8] sm:$0xff] %v62
    // Predicated region
    $region14: #{tpu_custom_call.1} parent=1 // pred_check
      _
    $region15: #{tpu_custom_call.1} parent=1 // pred_check_branch
      %66 = sbr.rel (0) target = $region17
    $region16: #{tpu_custom_call.1} parent=1 // pred_region
      %s68 = ssub.s32 256, 256
      %69 = vsyncadd [#allocation4], %s68
      %s71 = sshll.u32 [#allocation5], 4
      %s72 = int_to_ptr.vmem [resolvable:$true] %s71
      %74 = dma.vmem_to_hbm [thread:$0]  %s72, 256, %s2, [#allocation4]
    $region17: #{tpu_custom_call.1} parent=1 // pred_fallthru
      _
    // Predicated region
    $region18: #{tpu_custom_call.1} parent=1 // pred_check
      _
    $region19: #{tpu_custom_call.1} parent=1 // pred_check_branch
      %76 = sbr.rel (0) target = $region21
    $region20: #{tpu_custom_call.1} parent=1 // pred_region
      %77 = dma.done [#allocation4], 256
    $region21: #{tpu_custom_call.1} parent=1 // pred_fallthru
      _
    %78 = vsyncpa [#allocation3], 1
    %79 = vsyncpa [#allocation4], 1

</llo_original>
